<compile_context>
chip_gen: v7x
topology: tpu7x:2x2x1
jax: 0.10.0
libtpu: 0.0.40
codegen_flags: <defaults>
</compile_context>

<pallas_src>
import jax
import jax.numpy as jnp
from jax.experimental import pallas as pl
from jax.experimental.pallas import tpu as pltpu


# ----------------------------------------------------------------------------
# Fused kernel: global-avg-pool  ->  FC1+ReLU  ->  FC2+sigmoid  ->  channel scale
# ----------------------------------------------------------------------------
def _se_fused_kernel(x_ref, w1t_ref, w2t_ref, o_ref):
    # x_ref / o_ref : (Bt, C, HW)  NCHW-flattened block (HW on lanes, C on sublanes)
    # w1t_ref       : (C, Cr)      == fc1.weight.T
    # w2t_ref       : (Cr, C)      == fc2.weight.T   (lane-dense)
    hw = x_ref.shape[-1]

    # squeeze: average pool over the spatial (lane) axis, accumulated in f32.
    pooled = jnp.sum(x_ref[...], axis=-1, dtype=jnp.float32) * (1.0 / float(hw))  # (Bt, C)

    # excitation MLP: two tiny MXU matmuls in f32 (MXU is otherwise idle here).
    h = jnp.maximum(
        jnp.dot(pooled, w1t_ref[...], preferred_element_type=jnp.float32), 0.0)   # (Bt, Cr)
    g = jax.nn.sigmoid(
        jnp.dot(h, w2t_ref[...], preferred_element_type=jnp.float32))             # (Bt, C)

    # excite: cast the gate to the slab dtype, broadcast over lanes, and re-read the
    # slab from VMEM so the multiply streams load->mul->store instead of holding the
    # whole tile live across the MLP.
    gate = g.astype(o_ref.dtype)[:, :, None]                                      # (Bt, C, 1)
    o_ref[...] = x_ref[...] * gate


# ----------------------------------------------------------------------------
# Wrapper
# ----------------------------------------------------------------------------
def _vmem_budget_bytes() -> int:
    """~60% of physical VMEM per TensorCore (generation-aware, with a safe fallback)."""
    cap = 64 << 20  # conservative default == v7x per-TC VMEM
    try:
        info = pltpu.get_tpu_info()
        cap = int(getattr(info, "vmem_capacity_bytes", cap) or cap)
    except Exception:
        pass
    return int(cap * 0.6)


def se_layer(x_nchw, w1, w2):
    """SELayer forward.  x: (B, C, H, W);  w1: (C//r, C) = fc1.weight;  w2: (C, C//r) = fc2.weight."""
    b, c, h, w = x_nchw.shape
    hw = h * w
    cr = w1.shape[0]
    assert w1.shape == (cr, c) and w2.shape == (c, cr)

    x3 = x_nchw.reshape(b, c, hw)                    # contiguous -> free reshape
    w1t = jnp.asarray(w1, jnp.float32).T             # (C, Cr)
    w2t = jnp.asarray(w2, jnp.float32).T             # (Cr, C)  lane-dense

    itemsize = jnp.dtype(x_nchw.dtype).itemsize
    slab = c * hw * itemsize                         # one image's (C, HW) tile in bytes
    w_bytes = 2 * c * cr * 4
    margin = 2 << 20

    budget = _vmem_budget_bytes()
    # double-buffered input + output tiles: 2 * (in + out) * Bt * slab
    bt_vmem = max(1, (budget - w_bytes - margin) // (4 * slab))
    # keep >= ~8 grid steps when the batch allows it (pipelining / megacore sharding)
    bt_cap = max(1, min(int(bt_vmem), pl.cdiv(b, 8)))
    # largest divisor of b not exceeding the cap (avoids partial boundary blocks)
    bt = max(d for d in range(1, bt_cap + 1) if b % d == 0)
    grid = (b // bt,)

    vmem_limit = int(min(4 * bt * slab + w_bytes + margin, budget))
    vmem_limit = max(vmem_limit, 4 << 20)

    cost = pl.CostEstimate(
        flops=b * (2 * c * hw + 4 * c * cr),
        transcendentals=b * c,
        bytes_accessed=2 * b * slab + w_bytes,
    )

    out = pl.pallas_call(
        _se_fused_kernel,
        out_shape=jax.ShapeDtypeStruct((b, c, hw), x_nchw.dtype),
        grid=grid,
        in_specs=[
            pl.BlockSpec((bt, c, hw), lambda i: (i, 0, 0)),
            pl.BlockSpec((c, cr), lambda i: (0, 0)),
            pl.BlockSpec((cr, c), lambda i: (0, 0)),
        ],
        out_specs=pl.BlockSpec((bt, c, hw), lambda i: (i, 0, 0)),
        compiler_params=pltpu.CompilerParams(
            dimension_semantics=("parallel",),
            vmem_limit_bytes=vmem_limit,
        ),
        cost_estimate=cost,
    )(x3, w1t, w2t)
    return out.reshape(b, c, h, w)


# ----------------------------------------------------------------------------
# Demo + correctness check against a pure-JAX reference
# ----------------------------------------------------------------------------
if __name__ == "__main__":
    key = jax.random.PRNGKey(0)
    kx, k1, k2 = jax.random.split(key, 3)

    # Small shapes consistent with the module: reduction=16 (default) needs channel>=16;
    # channel=128 keeps the lane axis fully used and HW=256 is a 128-multiple (lane-dense).
    B, C, H, W = 2, 128, 16, 16
    reduction = 16
    Cr = C // reduction

    x = jax.random.normal(kx, (B, C, H, W), jnp.float32)
    bound1 = 1.0 / (C ** 0.5)
    w1 = jax.random.uniform(k1, (Cr, C), jnp.float32, -bound1, bound1)   # fc1.weight
    bound2 = 1.0 / (Cr ** 0.5)
    w2 = jax.random.uniform(k2, (C, Cr), jnp.float32, -bound2, bound2)   # fc2.weight

    out = jax.jit(se_layer)(x, w1, w2)
    out = jax.block_until_ready(out)

    # pure-JAX reference (same math as the PyTorch forward)
    pooled = jnp.mean(x, axis=(2, 3))                       # (B, C)
    hid = jnp.maximum(pooled @ w1.T, 0.0)                   # (B, Cr)
    gate = jax.nn.sigmoid(hid @ w2.T)                       # (B, C)
    ref = x * gate[:, :, None, None]

    assert out.shape == (B, C, H, W), out.shape
    assert bool(jnp.all(jnp.isfinite(out)))
    assert bool(jnp.allclose(out, ref, atol=1e-4, rtol=1e-4))
    print("KERNEL_OK")
</pallas_src>

<mosaic_0001>
module attributes {stable_mosaic.version = 11 : i64} {
  func.func @_se_fused_kernel(%arg0: i32, %arg1: memref<1x128x256xf32, #tpu.memory_space<vmem>>, %arg2: memref<128x8xf32, #tpu.memory_space<vmem>>, %arg3: memref<8x128xf32, #tpu.memory_space<vmem>>, %arg4: memref<1x128x256xf32, #tpu.memory_space<vmem>>) attributes {dimension_semantics = [#tpu.dimension_semantics<parallel>], iteration_bounds = array<i64: 2>, scalar_prefetch = 0 : i64, scratch_operands = 0 : i64, tpu.core_type = #tpu.core_type<tc>, window_params = [{transform_indices = @transform_0, window_bounds = array<i64: 1, 128, 256>}, {pipeline_mode = #tpu.pipeline_mode<synchronous>, transform_indices = @transform_1, window_bounds = array<i64: 128, 8>}, {pipeline_mode = #tpu.pipeline_mode<synchronous>, transform_indices = @transform_2, window_bounds = array<i64: 8, 128>}, {transform_indices = @transform_3, window_bounds = array<i64: 1, 128, 256>}]} {
    %c0 = arith.constant 0 : index
    %c0_0 = arith.constant 0 : index
    %c0_1 = arith.constant 0 : index
    %0 = vector.load %arg1[%c0, %c0_0, %c0_1] : memref<1x128x256xf32, #tpu.memory_space<vmem>>, vector<1x128x256xf32>
    %cst = arith.constant dense<0.000000e+00> : vector<1x128xf32>
    %1 = vector.multi_reduction <add>, %0, %cst [2] : vector<1x128x256xf32> to vector<1x128xf32>
    %cst_2 = arith.constant 3.906250e-03 : f32
    %2 = vector.broadcast %cst_2 : f32 to vector<1x128xf32>
    %3 = arith.mulf %1, %2 : vector<1x128xf32>
    %c0_3 = arith.constant 0 : index
    %c0_4 = arith.constant 0 : index
    %4 = vector.load %arg2[%c0_3, %c0_4] : memref<128x8xf32, #tpu.memory_space<vmem>>, vector<128x8xf32>
    %cst_5 = arith.constant dense<0.000000e+00> : vector<1x8xf32>
    %5 = tpu.matmul %3, %4, %cst_5 {dimension_numbers = #tpu.dot_dimension_numbers<[1], [0], [0], [1], [0, 0, 1, 1], [], []>} : vector<1x128xf32>, vector<128x8xf32>, vector<1x8xf32> -> vector<1x8xf32>
    %cst_6 = arith.constant 0.000000e+00 : f32
    %6 = vector.broadcast %cst_6 : f32 to vector<1x8xf32>
    %7 = arith.maximumf %5, %6 : vector<1x8xf32>
    %c0_7 = arith.constant 0 : index
    %c0_8 = arith.constant 0 : index
    %8 = vector.load %arg3[%c0_7, %c0_8] : memref<8x128xf32, #tpu.memory_space<vmem>>, vector<8x128xf32>
    %cst_9 = arith.constant dense<0.000000e+00> : vector<1x128xf32>
    %9 = tpu.matmul %7, %8, %cst_9 {dimension_numbers = #tpu.dot_dimension_numbers<[1], [0], [0], [1], [0, 0, 1, 1], [], []>} : vector<1x8xf32>, vector<8x128xf32>, vector<1x128xf32> -> vector<1x128xf32>
    %10 = arith.negf %9 : vector<1x128xf32>
    %11 = math.exp %10 : vector<1x128xf32>
    %cst_10 = arith.constant 1.000000e+00 : f32
    %12 = vector.broadcast %cst_10 : f32 to vector<1x128xf32>
    %13 = arith.addf %12, %11 : vector<1x128xf32>
    %14 = arith.divf %12, %13 : vector<1x128xf32>
    %15 = vector.shape_cast %14 : vector<1x128xf32> to vector<1x128x1xf32>
    %c0_11 = arith.constant 0 : index
    %c0_12 = arith.constant 0 : index
    %c0_13 = arith.constant 0 : index
    %16 = vector.load %arg1[%c0_11, %c0_12, %c0_13] : memref<1x128x256xf32, #tpu.memory_space<vmem>>, vector<1x128x256xf32>
    %17 = vector.broadcast %15 : vector<1x128x1xf32> to vector<1x128x256xf32>
    %18 = arith.mulf %16, %17 : vector<1x128x256xf32>
    %c0_14 = arith.constant 0 : index
    %c0_15 = arith.constant 0 : index
    %c0_16 = arith.constant 0 : index
    %19 = vector.load %arg4[%c0_14, %c0_15, %c0_16] : memref<1x128x256xf32, #tpu.memory_space<vmem>>, vector<1x128x256xf32>
    tpu.vector_store %arg4[%c0_14, %c0_15, %c0_16], %18 {strides = array<i32>} : memref<1x128x256xf32, #tpu.memory_space<vmem>>, vector<1x128x256xf32>,
    return
  }
  func.func @transform_0(%arg0: i32) -> (i32, i32, i32) {
    %c0_i32 = arith.constant 0 : i32
    %c0_i32_0 = arith.constant 0 : i32
    %c0_i32_1 = arith.constant 0 : i32
    return %arg0, %c0_i32, %c0_i32_0 : i32, i32, i32
  }
  func.func @transform_1(%arg0: i32) -> (i32, i32) {
    %c0_i32 = arith.constant 0 : i32
    %c0_i32_0 = arith.constant 0 : i32
    %c0_i32_1 = arith.constant 0 : i32
    return %c0_i32, %c0_i32_0 : i32, i32
  }
  func.func @transform_2(%arg0: i32) -> (i32, i32) {
    %c0_i32 = arith.constant 0 : i32
    %c0_i32_0 = arith.constant 0 : i32
    %c0_i32_1 = arith.constant 0 : i32
    return %c0_i32, %c0_i32_0 : i32, i32
  }
  func.func @transform_3(%arg0: i32) -> (i32, i32, i32) {
    %c0_i32 = arith.constant 0 : i32
    %c0_i32_0 = arith.constant 0 : i32
    %c0_i32_1 = arith.constant 0 : i32
    return %arg0, %c0_i32, %c0_i32_0 : i32, i32, i32
  }
}

</mosaic_0001>

<llo_original>
// kernel: se_layer.1
$region0: #{se_layer.1}
  #allocation0 [shape = 'u32[]', space=smem, size = 0x4, offset = 0x4, fixed_abs, tag = 'smem constant byte address 0x4 - core index']
  #allocation1 [shape = 'u32[144,128]{1,0:T(1,128)}', space=vmem, size = 0x12000, scoped, tag = 'internal scratch']
  %s0 = inlined_call_operand.vmem [shape: f32[2,128,256], index: 0, kind: input, shape index: {}]
  %s1 = inlined_call_operand.vmem [shape: f32[128,8], index: 1, kind: input, shape index: {}]
  %s2 = inlined_call_operand.vmem [shape: f32[8,128], index: 2, kind: input, shape index: {}]
  %s3 = inlined_call_operand.vmem [shape: f32[2,128,256], index: 3, kind: output, shape index: {}]
  %s4 = sld [smem:[#allocation0]]
  $region45: #{se_layer.1} parent=0
    _
  %s6 = ssub.s32 1, %s4
  %s7 = scalar_select 0, %s6, %s4
  loop: start=0, step=1, limit=4
  $region2: #{se_layer.1} parent=0 // loop_pre_header
    _
  $region3: #{se_layer.1} parent=0 // loop_header
    %s9 = sphi 0, %s13
    %p10 = scmp.ge.s32.totalorder %s9, 4
    %s19 = sphi 0, %s21
    %s22 = sphi 0, %s19
    %s23 = sphi 0, %s22
    %s39 = sphi 0, %s23
    %s43 = sphi 0, %s43
    %s45 = sphi 0, %s43
    %s46 = sphi 0, %s45
    %s60 = sphi 0, %s46
    %s64 = sphi 0, %s64
    %s66 = sphi 0, %s64
    %s67 = sphi 0, %s66
    %s81 = sphi 0, %s67
    %s87 = sphi 0, %s89
    %s90 = sphi 0, %s87
    %s91 = sphi 0, %s90
    %s107 = sphi 0, %s91
  $region4: #{se_layer.1} parent=0 // loop_header_branch
    %12 = sbr.rel (%p10) target = $region8
  $region5: #{se_layer.1} parent=0 // loop_body
    %s14 = ssub.s32 %s9, 1
    %s15 = ssub.s32 %s9, 2
    %s16 = sadd.s32 %s9, 1
    %s17 = ssub.s32 %s9, %s16
    %p18 = scmp.eq.s32.totalorder %s17, 0
    %s20 = sadd.s32 %s19, 1
    %s21 = scalar_select %p18, %s19, %s20
    %p24 = pneg %p18
    %p25 = scmp.eq.s32.totalorder %s9, 1
    %p26 = por %p24, %p25
    %p27 = scmp.ne.s32.totalorder %s19, %s22
    %p28 = scmp.eq.s32.totalorder %s9, 0
    %p29 = por %p27, %p28
    %p30 = scmp.ne.s32.totalorder %s19, %s22
    %p31 = scmp.eq.s32.totalorder %s14, 1
    %p32 = por %p30, %p31
    %p33 = scmp.ne.s32.totalorder %s22, %s23
    %p34 = scmp.eq.s32.totalorder %s14, 0
    %p35 = por %p33, %p34
    %p36 = scmp.ne.s32.totalorder %s22, %s23
    %p37 = scmp.eq.s32.totalorder %s15, 1
    %p38 = por %p36, %p37
    %p40 = scmp.ne.s32.totalorder %s23, %s39
    %p41 = scmp.eq.s32.totalorder %s15, 0
    %p42 = por %p40, %p41
    %s44 = sadd.s32 %s43, 1
    %p47 = scmp.eq.s32.totalorder %s9, 1
    %p48 = scmp.ne.s32.totalorder %s43, %s45
    %p49 = scmp.eq.s32.totalorder %s9, 0
    %p50 = por %p48, %p49
    %p51 = scmp.ne.s32.totalorder %s43, %s45
    %p52 = scmp.eq.s32.totalorder %s14, 1
    %p53 = por %p51, %p52
    %p54 = scmp.ne.s32.totalorder %s45, %s46
    %p55 = scmp.eq.s32.totalorder %s14, 0
    %p56 = por %p54, %p55
    %p57 = scmp.ne.s32.totalorder %s45, %s46
    %p58 = scmp.eq.s32.totalorder %s15, 1
    %p59 = por %p57, %p58
    %p61 = scmp.ne.s32.totalorder %s46, %s60
    %p62 = scmp.eq.s32.totalorder %s15, 0
    %p63 = por %p61, %p62
    %s65 = sadd.s32 %s64, 1
    %p68 = scmp.eq.s32.totalorder %s9, 1
    %p69 = scmp.ne.s32.totalorder %s64, %s66
    %p70 = scmp.eq.s32.totalorder %s9, 0
    %p71 = por %p69, %p70
    %p72 = scmp.ne.s32.totalorder %s64, %s66
    %p73 = scmp.eq.s32.totalorder %s14, 1
    %p74 = por %p72, %p73
    %p75 = scmp.ne.s32.totalorder %s66, %s67
    %p76 = scmp.eq.s32.totalorder %s14, 0
    %p77 = por %p75, %p76
    %p78 = scmp.ne.s32.totalorder %s66, %s67
    %p79 = scmp.eq.s32.totalorder %s15, 1
    %p80 = por %p78, %p79
    %p82 = scmp.ne.s32.totalorder %s67, %s81
    %p83 = scmp.eq.s32.totalorder %s15, 0
    %p84 = por %p82, %p83
    %s85 = ssub.s32 %s9, %s16
    %p86 = scmp.eq.s32.totalorder %s85, 0
    %s88 = sadd.s32 %s87, 1
    %s89 = scalar_select %p86, %s87, %s88
    %p92 = pneg %p86
    %p93 = scmp.eq.s32.totalorder %s9, 1
    %p94 = por %p92, %p93
    %p95 = scmp.ne.s32.totalorder %s87, %s90
    %p96 = scmp.eq.s32.totalorder %s9, 0
    %p97 = por %p95, %p96
    %p98 = scmp.ne.s32.totalorder %s87, %s90
    %p99 = scmp.eq.s32.totalorder %s14, 1
    %p100 = por %p98, %p99
    %p101 = scmp.ne.s32.totalorder %s90, %s91
    %p102 = scmp.eq.s32.totalorder %s14, 0
    %p103 = por %p101, %p102
    %p104 = scmp.ne.s32.totalorder %s90, %s91
    %p105 = scmp.eq.s32.totalorder %s15, 1
    %p106 = por %p104, %p105
    %p108 = scmp.ne.s32.totalorder %s91, %s107
    %p109 = scmp.eq.s32.totalorder %s15, 0
    %p110 = por %p108, %p109
    %p111 = scmp.le.s32.totalorder 1, %s9
    %p112 = scmp.lt.s32.totalorder %s9, 3
    %p113 = pnand %p111, %p112
    %p114 = pneg %p113
    // Predicated region
    $region9: #{se_layer.1} parent=5 // pred_check
      _
    $region10: #{se_layer.1} parent=5 // pred_check_branch
      %116 = sbr.rel (%p113) target = $region12
    $region11: #{se_layer.1} parent=5 // pred_region
      %s117 = ssub.s32 %s9, 1
      // Predicated region
      $region13: #{se_layer.1} parent=11 // pred_check
        %p118 = pneg %p56
      $region14: #{se_layer.1} parent=11 // pred_check_branch
        %120 = sbr.rel (%p118) target = $region16
      $region15: #{se_layer.1} parent=11 // pred_region
        _
      $region16: #{se_layer.1} parent=11 // pred_fallthru
        _
      // Predicated region
      $region17: #{se_layer.1} parent=11 // pred_check
        %p121 = pneg %p77
      $region18: #{se_layer.1} parent=11 // pred_check_branch
        %123 = sbr.rel (%p121) target = $region20
      $region19: #{se_layer.1} parent=11 // pred_region
        _
      $region20: #{se_layer.1} parent=11 // pred_fallthru
        _
    $region12: #{se_layer.1} parent=5 // pred_fallthru
      _
    %p124 = scmp.lt.s32.totalorder %s9, 2
    // Predicated region
    $region21: #{se_layer.1} parent=5 // pred_check
      %p125 = pneg %p124
    $region22: #{se_layer.1} parent=5 // pred_check_branch
      %127 = sbr.rel (%p125) target = $region24
    $region23: #{se_layer.1} parent=5 // pred_region
      // Predicated region
      $region25: #{se_layer.1} parent=23 // pred_check
        %p128 = pneg %p29
      $region26: #{se_layer.1} parent=23 // pred_check_branch
        %130 = sbr.rel (%p128) target = $region28
      $region27: #{se_layer.1} parent=23 // pred_region
        %p131 = scmp.lt.s32.totalorder %s9, 1
        %s132 = scalar_select %p131, %s9, 1
        %s133 = smul.addr %s132, 32
        %s134 = smul.addr %s133, 8
        %s135 = scalar_lea.vmem %s0, %s134
      $region28: #{se_layer.1} parent=23 // pred_fallthru
        _
    $region24: #{se_layer.1} parent=5 // pred_fallthru
      _
    %p136 = scmp.le.s32.totalorder 1, %s9
    %p137 = scmp.lt.s32.totalorder %s9, 3
    %p138 = pnand %p136, %p137
    %p139 = pneg %p138
    // Predicated region
    $region29: #{se_layer.1} parent=5 // pred_check
      _
    $region30: #{se_layer.1} parent=5 // pred_check_branch
      %141 = sbr.rel (%p138) target = $region32
    $region31: #{se_layer.1} parent=5 // pred_region
      %s142 = ssub.s32 %s9, 1
      %p143 = scmp.lt.s32.totalorder %s14, 1
      %s144 = scalar_select %p143, %s14, 1
      %s145 = smul.addr %s144, 32
      %s146 = smul.addr %s145, 8
      %s147 = scalar_lea.vmem %s0, %s146
      %p148 = pneg %p35
      %p149 = pneg %p32
      %p150 = pneg %p56
      %p151 = pneg %p53
      %p152 = pneg %p77
      %p153 = pneg %p74
      %p154 = pneg %p103
      %p155 = pneg %p100
      %p156 = scmp.lt.s32.totalorder %s14, 1
      %s157 = scalar_select %p156, %s14, 1
      %s158 = smul.addr %s157, 32
      %s159 = smul.addr %s158, 8
      %s160 = scalar_lea.vmem %s3, %s159
      %p161 = scmp.lt.s32.totalorder %s14, 1
      %s162 = scalar_select %p161, %s14, 1
      %s163 = smul.addr %s162, 32
      %s164 = smul.addr %s163, 8
      %s165 = scalar_lea.vmem %s0, %s164
      %p166 = scmp.lt.s32.totalorder %s14, 1
      %s167 = scalar_select %p166, %s14, 1
      %s168 = smul.addr %s167, 32
      %s169 = smul.addr %s168, 8
      %s170 = scalar_lea.vmem %s3, %s169
      %v171 = vld [vmem:[%s165] sm:$0xff]
      %v172 = vld [vmem:[%s165 + $0x8] sm:$0xff]
      %v173 = vld [vmem:[%s165 + $0x10] sm:$0xff]
      %v174 = vld [vmem:[%s165 + $0x18] sm:$0xff]
      %v175 = vld [vmem:[%s165 + $0x20] sm:$0xff]
      %v176 = vld [vmem:[%s165 + $0x28] sm:$0xff]
      %v177 = vld [vmem:[%s165 + $0x30] sm:$0xff]
      %v178 = vld [vmem:[%s165 + $0x38] sm:$0xff]
      %v179 = vld [vmem:[%s165 + $0x40] sm:$0xff]
      %v180 = vld [vmem:[%s165 + $0x48] sm:$0xff]
      %v181 = vld [vmem:[%s165 + $0x50] sm:$0xff]
      %v182 = vld [vmem:[%s165 + $0x58] sm:$0xff]
      %v183 = vld [vmem:[%s165 + $0x60] sm:$0xff]
      %v184 = vld [vmem:[%s165 + $0x68] sm:$0xff]
      %v185 = vld [vmem:[%s165 + $0x70] sm:$0xff]
      %v186 = vld [vmem:[%s165 + $0x78] sm:$0xff]
      %v187 = vld [vmem:[%s165 + $0x80] sm:$0xff]
      %v188 = vld [vmem:[%s165 + $0x88] sm:$0xff]
      %v189 = vld [vmem:[%s165 + $0x90] sm:$0xff]
      %v190 = vld [vmem:[%s165 + $0x98] sm:$0xff]
      %v191 = vld [vmem:[%s165 + $0xa0] sm:$0xff]
      %v192 = vld [vmem:[%s165 + $0xa8] sm:$0xff]
      %v193 = vld [vmem:[%s165 + $0xb0] sm:$0xff]
      %v194 = vld [vmem:[%s165 + $0xb8] sm:$0xff]
      %v195 = vld [vmem:[%s165 + $0xc0] sm:$0xff]
      %v196 = vld [vmem:[%s165 + $0xc8] sm:$0xff]
      %v197 = vld [vmem:[%s165 + $0xd0] sm:$0xff]
      %v198 = vld [vmem:[%s165 + $0xd8] sm:$0xff]
      %v199 = vld [vmem:[%s165 + $0xe0] sm:$0xff]
      %v200 = vld [vmem:[%s165 + $0xe8] sm:$0xff]
      %v201 = vld [vmem:[%s165 + $0xf0] sm:$0xff]
      %v202 = vld [vmem:[%s165 + $0xf8] sm:$0xff]
      %v203 = vadd.f32 %v171, %v172
      %204 = vadd.xlane.f32.xlu0 %v203
      %v205 = vpop.xlane.xlu0 %204
      %v206 = vadd.f32 %v173, %v174
      %207 = vadd.xlane.f32.xlu0 %v206
      %v208 = vpop.xlane.xlu0 %207
      %v209 = vadd.f32 %v175, %v176
      %210 = vadd.xlane.f32.xlu0 %v209
      %v211 = vpop.xlane.xlu0 %210
      %v212 = vadd.f32 %v177, %v178
      %213 = vadd.xlane.f32.xlu0 %v212
      %v214 = vpop.xlane.xlu0 %213
      %v215 = vadd.f32 %v179, %v180
      %216 = vadd.xlane.f32.xlu0 %v215
      %v217 = vpop.xlane.xlu0 %216
      %v218 = vadd.f32 %v181, %v182
      %219 = vadd.xlane.f32.xlu0 %v218
      %v220 = vpop.xlane.xlu0 %219
      %v221 = vadd.f32 %v183, %v184
      %222 = vadd.xlane.f32.xlu0 %v221
      %v223 = vpop.xlane.xlu0 %222
      %v224 = vadd.f32 %v185, %v186
      %225 = vadd.xlane.f32.xlu0 %v224
      %v226 = vpop.xlane.xlu0 %225
      %v227 = vadd.f32 %v187, %v188
      %228 = vadd.xlane.f32.xlu0 %v227
      %v229 = vpop.xlane.xlu0 %228
      %v230 = vadd.f32 %v189, %v190
      %231 = vadd.xlane.f32.xlu0 %v230
      %v232 = vpop.xlane.xlu0 %231
      %v233 = vadd.f32 %v191, %v192
      %234 = vadd.xlane.f32.xlu0 %v233
      %v235 = vpop.xlane.xlu0 %234
      %v236 = vadd.f32 %v193, %v194
      %237 = vadd.xlane.f32.xlu0 %v236
      %v238 = vpop.xlane.xlu0 %237
      %v239 = vadd.f32 %v195, %v196
      %240 = vadd.xlane.f32.xlu0 %v239
      %v241 = vpop.xlane.xlu0 %240
      %v242 = vadd.f32 %v197, %v198
      %243 = vadd.xlane.f32.xlu0 %v242
      %v244 = vpop.xlane.xlu0 %243
      %v245 = vadd.f32 %v199, %v200
      %246 = vadd.xlane.f32.xlu0 %v245
      %v247 = vpop.xlane.xlu0 %246
      %v248 = vadd.f32 %v201, %v202
      %249 = vadd.xlane.f32.xlu0 %v248
      %v250 = vpop.xlane.xlu0 %249
      %v251 = vmul.f32 %v205, 0.00390625
      %v252 = vmul.f32 %v208, 0.00390625
      %v253 = vmul.f32 %v211, 0.00390625
      %v254 = vmul.f32 %v214, 0.00390625
      %v255 = vmul.f32 %v217, 0.00390625
      %v256 = vmul.f32 %v220, 0.00390625
      %v257 = vmul.f32 %v223, 0.00390625
      %v258 = vmul.f32 %v226, 0.00390625
      %v259 = vmul.f32 %v229, 0.00390625
      %v260 = vmul.f32 %v232, 0.00390625
      %v261 = vmul.f32 %v235, 0.00390625
      %v262 = vmul.f32 %v238, 0.00390625
      %v263 = vmul.f32 %v241, 0.00390625
      %v264 = vmul.f32 %v244, 0.00390625
      %v265 = vmul.f32 %v247, 0.00390625
      %v266 = vmul.f32 %v250, 0.00390625
      %v267 = vld [vmem:[%s1] sm:$0xff]
      %v268 = vld [vmem:[%s1 + $0x8] sm:$0xff]
      %v269 = vld [vmem:[%s1 + $0x10] sm:$0xff]
      %v270 = vld [vmem:[%s1 + $0x18] sm:$0xff]
      %v271 = vld [vmem:[%s1 + $0x20] sm:$0xff]
      %v272 = vld [vmem:[%s1 + $0x28] sm:$0xff]
      %v273 = vld [vmem:[%s1 + $0x30] sm:$0xff]
      %v274 = vld [vmem:[%s1 + $0x38] sm:$0xff]
      %v275 = vld [vmem:[%s1 + $0x40] sm:$0xff]
      %v276 = vld [vmem:[%s1 + $0x48] sm:$0xff]
      %v277 = vld [vmem:[%s1 + $0x50] sm:$0xff]
      %v278 = vld [vmem:[%s1 + $0x58] sm:$0xff]
      %v279 = vld [vmem:[%s1 + $0x60] sm:$0xff]
      %v280 = vld [vmem:[%s1 + $0x68] sm:$0xff]
      %v281 = vld [vmem:[%s1 + $0x70] sm:$0xff]
      %v282 = vld [vmem:[%s1 + $0x78] sm:$0xff]
      %v299 = vlaneseq
      %v300 = vand.u32 %v299, 127
      %v301 = vlaneseq
      %v302 = vshrl.u32 %v301, 7
      %v303 = vsub.s32 %v300, %v302
      %v304 = vrot.slane %v251, %v303
      %v305 = vadd.s32 %v300, 4294967288
      %v306 = vlaneseq
      %v307 = vshrl.u32 %v306, 7
      %v308 = vsub.s32 %v305, %v307
      %v309 = vrot.slane %v252, %v308
      %vm310 = vcmask 130112
      %v311 = vsel %vm310, %v309, %v304
      %v312 = vadd.s32 %v300, 4294967280
      %v313 = vlaneseq
      %v314 = vshrl.u32 %v313, 7
      %v315 = vsub.s32 %v312, %v314
      %v316 = vrot.slane %v253, %v315
      %vm317 = vcmask 195712
      %v318 = vsel %vm317, %v316, %v311
      %v319 = vadd.s32 %v300, 4294967272
      %v320 = vlaneseq
      %v321 = vshrl.u32 %v320, 7
      %v322 = vsub.s32 %v319, %v321
      %v323 = vrot.slane %v254, %v322
      %vm324 = vcmask 261312
      %v325 = vsel %vm324, %v323, %v318
      %v326 = vadd.s32 %v300, 4294967264
      %v327 = vlaneseq
      %v328 = vshrl.u32 %v327, 7
      %v329 = vsub.s32 %v326, %v328
      %v330 = vrot.slane %v255, %v329
      %vm331 = vcmask 326912
      %v332 = vsel %vm331, %v330, %v325
      %v333 = vadd.s32 %v300, 4294967256
      %v334 = vlaneseq
      %v335 = vshrl.u32 %v334, 7
      %v336 = vsub.s32 %v333, %v335
      %v337 = vrot.slane %v256, %v336
      %vm338 = vcmask 392512
      %v339 = vsel %vm338, %v337, %v332
      %v340 = vadd.s32 %v300, 4294967248
      %v341 = vlaneseq
      %v342 = vshrl.u32 %v341, 7
      %v343 = vsub.s32 %v340, %v342
      %v344 = vrot.slane %v257, %v343
      %vm345 = vcmask 458112
      %v346 = vsel %vm345, %v344, %v339
      %v347 = vadd.s32 %v300, 4294967240
      %v348 = vlaneseq
      %v349 = vshrl.u32 %v348, 7
      %v350 = vsub.s32 %v347, %v349
      %v351 = vrot.slane %v258, %v350
      %vm352 = vcmask 523712
      %v353 = vsel %vm352, %v351, %v346
      %v354 = vadd.s32 %v300, 4294967232
      %v355 = vlaneseq
      %v356 = vshrl.u32 %v355, 7
      %v357 = vsub.s32 %v354, %v356
      %v358 = vrot.slane %v259, %v357
      %vm359 = vcmask 589312
      %v360 = vsel %vm359, %v358, %v353
      %v361 = vadd.s32 %v300, 4294967224
      %v362 = vlaneseq
      %v363 = vshrl.u32 %v362, 7
      %v364 = vsub.s32 %v361, %v363
      %v365 = vrot.slane %v260, %v364
      %vm366 = vcmask 654912
      %v367 = vsel %vm366, %v365, %v360
      %v368 = vadd.s32 %v300, 4294967216
      %v369 = vlaneseq
      %v370 = vshrl.u32 %v369, 7
      %v371 = vsub.s32 %v368, %v370
      %v372 = vrot.slane %v261, %v371
      %vm373 = vcmask 720512
      %v374 = vsel %vm373, %v372, %v367
      %v375 = vadd.s32 %v300, 4294967208
      %v376 = vlaneseq
      %v377 = vshrl.u32 %v376, 7
      %v378 = vsub.s32 %v375, %v377
      %v379 = vrot.slane %v262, %v378
      %vm380 = vcmask 786112
      %v381 = vsel %vm380, %v379, %v374
      %v382 = vadd.s32 %v300, 4294967200
      %v383 = vlaneseq
      %v384 = vshrl.u32 %v383, 7
      %v385 = vsub.s32 %v382, %v384
      %v386 = vrot.slane %v263, %v385
      %vm387 = vcmask 851712
      %v388 = vsel %vm387, %v386, %v381
      %v389 = vadd.s32 %v300, 4294967192
      %v390 = vlaneseq
      %v391 = vshrl.u32 %v390, 7
      %v392 = vsub.s32 %v389, %v391
      %v393 = vrot.slane %v264, %v392
      %vm394 = vcmask 917312
      %v395 = vsel %vm394, %v393, %v388
      %v396 = vadd.s32 %v300, 4294967184
      %v397 = vlaneseq
      %v398 = vshrl.u32 %v397, 7
      %v399 = vsub.s32 %v396, %v398
      %v400 = vrot.slane %v265, %v399
      %vm401 = vcmask 982912
      %v402 = vsel %vm401, %v400, %v395
      %v403 = vadd.s32 %v300, 4294967176
      %v404 = vlaneseq
      %v405 = vshrl.u32 %v404, 7
      %v406 = vsub.s32 %v403, %v405
      %v407 = vrot.slane %v266, %v406
      %vm408 = vcmask 1048512
      %v409 = vsel %vm408, %v407, %v402
      %411 = vmatprep.subr.mxu0 0.0
      %412 = vmatpush1.msra.mxu0 %v267
      %413 = vmatprep.subr.mxu0 0.0
      %414 = vmatpush1.msra.mxu0 %v268
      %415 = vmatprep.subr.mxu0 0.0
      %416 = vmatpush1.msra.mxu0 %v269
      %417 = vmatprep.subr.mxu0 0.0
      %418 = vmatpush1.msra.mxu0 %v270
      %419 = vmatprep.subr.mxu0 0.0
      %420 = vmatpush1.msra.mxu0 %v271
      %421 = vmatprep.subr.mxu0 0.0
      %422 = vmatpush1.msra.mxu0 %v272
      %423 = vmatprep.subr.mxu0 0.0
      %424 = vmatpush1.msra.mxu0 %v273
      %425 = vmatprep.subr.mxu0 0.0
      %426 = vmatpush1.msra.mxu0 %v274
      %427 = vmatprep.subr.mxu0 0.0
      %428 = vmatpush1.msra.mxu0 %v275
      %429 = vmatprep.subr.mxu0 0.0
      %430 = vmatpush1.msra.mxu0 %v276
      %431 = vmatprep.subr.mxu0 0.0
      %432 = vmatpush1.msra.mxu0 %v277
      %433 = vmatprep.subr.mxu0 0.0
      %434 = vmatpush1.msra.mxu0 %v278
      %435 = vmatprep.subr.mxu0 0.0
      %436 = vmatpush1.msra.mxu0 %v279
      %437 = vmatprep.subr.mxu0 0.0
      %438 = vmatpush1.msra.mxu0 %v280
      %439 = vmatprep.subr.mxu0 0.0
      %440 = vmatpush1.msra.mxu0 %v281
      %441 = vmatprep.subr.mxu0 0.0
      %442 = vmatpush1.msra.mxu0 %v282
      %443 = vmatprep.subr.mxu0 0.0
      %444 = vmatpush1.msra.mxu0 0.0
      %445 = vmatprep.subr.mxu0 0.0
      %446 = vmatpush1.msra.mxu0 0.0
      %447 = vmatprep.subr.mxu0 0.0
      %448 = vmatpush1.msra.mxu0 0.0
      %449 = vmatprep.subr.mxu0 0.0
      %450 = vmatpush1.msra.mxu0 0.0
      %451 = vmatprep.subr.mxu0 0.0
      %452 = vmatpush1.msra.mxu0 0.0
      %453 = vmatprep.subr.mxu0 0.0
      %454 = vmatpush1.msra.mxu0 0.0
      %455 = vmatprep.subr.mxu0 0.0
      %456 = vmatpush1.msra.mxu0 0.0
      %457 = vmatprep.subr.mxu0 0.0
      %458 = vmatpush1.msra.mxu0 0.0
      %459 = vmatprep.subr.mxu0 0.0
      %460 = vmatpush1.msra.mxu0 0.0
      %461 = vmatprep.subr.mxu0 0.0
      %462 = vmatpush1.msra.mxu0 0.0
      %463 = vmatprep.subr.mxu0 0.0
      %464 = vmatpush1.msra.mxu0 0.0
      %465 = vmatprep.subr.mxu0 0.0
      %466 = vmatpush1.msra.mxu0 0.0
      %467 = vmatprep.subr.mxu0 0.0
      %468 = vmatpush1.msra.mxu0 0.0
      %469 = vmatprep.subr.mxu0 0.0
      %470 = vmatpush1.msra.mxu0 0.0
      %471 = vmatprep.subr.mxu0 0.0
      %472 = vmatpush1.msra.mxu0 0.0
      %473 = vmatprep.subr.mxu0 0.0
      %474 = vmatpush1.msra.mxu0 0.0
      %475 = vmatprep.mubr.f32.mxu0 0.0
      %476 = vmatmul.mubr.f32.gmra.mrb[0].mxu0 %v409
      %v477 = vpop.f32.mrb[0].mxu0
      %v478 = vadd.f32 0.0, %v477
      %v479 = vpop.f32.mrb[0].mxu0
      %480 = vdwg.mxu0
      %v481 = vmax.f32 %v478, 0.0
      %v482 = vld [vmem:[%s2] sm:$0xff]
      %vm483 = vcmask 64512
      %v485 = vsel %vm483, %v481, 0
      %487 = vmatprep.subr.mxu0 0.0
      %488 = vmatpush1.msra.mxu0 %v482
      %489 = vmatprep.subr.mxu0 0.0
      %490 = vmatpush1.msra.mxu0 0.0
      %491 = vmatprep.subr.mxu0 0.0
      %492 = vmatpush1.msra.mxu0 0.0
      %493 = vmatprep.subr.mxu0 0.0
      %494 = vmatpush1.msra.mxu0 0.0
      %495 = vmatprep.subr.mxu0 0.0
      %496 = vmatpush1.msra.mxu0 0.0
      %497 = vmatprep.subr.mxu0 0.0
      %498 = vmatpush1.msra.mxu0 0.0
      %499 = vmatprep.subr.mxu0 0.0
      %500 = vmatpush1.msra.mxu0 0.0
      %501 = vmatprep.subr.mxu0 0.0
      %502 = vmatpush1.msra.mxu0 0.0
      %503 = vmatprep.subr.mxu0 0.0
      %504 = vmatpush1.msra.mxu0 0.0
      %505 = vmatprep.subr.mxu0 0.0
      %506 = vmatpush1.msra.mxu0 0.0
      %507 = vmatprep.subr.mxu0 0.0
      %508 = vmatpush1.msra.mxu0 0.0
      %509 = vmatprep.subr.mxu0 0.0
      %510 = vmatpush1.msra.mxu0 0.0
      %511 = vmatprep.subr.mxu0 0.0
      %512 = vmatpush1.msra.mxu0 0.0
      %513 = vmatprep.subr.mxu0 0.0
      %514 = vmatpush1.msra.mxu0 0.0
      %515 = vmatprep.subr.mxu0 0.0
      %516 = vmatpush1.msra.mxu0 0.0
      %517 = vmatprep.subr.mxu0 0.0
      %518 = vmatpush1.msra.mxu0 0.0
      %519 = vmatprep.subr.mxu0 0.0
      %520 = vmatpush1.msra.mxu0 0.0
      %521 = vmatprep.subr.mxu0 0.0
      %522 = vmatpush1.msra.mxu0 0.0
      %523 = vmatprep.subr.mxu0 0.0
      %524 = vmatpush1.msra.mxu0 0.0
      %525 = vmatprep.subr.mxu0 0.0
      %526 = vmatpush1.msra.mxu0 0.0
      %527 = vmatprep.subr.mxu0 0.0
      %528 = vmatpush1.msra.mxu0 0.0
      %529 = vmatprep.subr.mxu0 0.0
      %530 = vmatpush1.msra.mxu0 0.0
      %531 = vmatprep.subr.mxu0 0.0
      %532 = vmatpush1.msra.mxu0 0.0
      %533 = vmatprep.subr.mxu0 0.0
      %534 = vmatpush1.msra.mxu0 0.0
      %535 = vmatprep.subr.mxu0 0.0
      %536 = vmatpush1.msra.mxu0 0.0
      %537 = vmatprep.subr.mxu0 0.0
      %538 = vmatpush1.msra.mxu0 0.0
      %539 = vmatprep.subr.mxu0 0.0
      %540 = vmatpush1.msra.mxu0 0.0
      %541 = vmatprep.subr.mxu0 0.0
      %542 = vmatpush1.msra.mxu0 0.0
      %543 = vmatprep.subr.mxu0 0.0
      %544 = vmatpush1.msra.mxu0 0.0
      %545 = vmatprep.subr.mxu0 0.0
      %546 = vmatpush1.msra.mxu0 0.0
      %547 = vmatprep.subr.mxu0 0.0
      %548 = vmatpush1.msra.mxu0 0.0
      %549 = vmatprep.subr.mxu0 0.0
      %550 = vmatpush1.msra.mxu0 0.0
      %551 = vmatprep.mubr.f32.mxu0 0.0
      %552 = vmatmul.mubr.f32.gmra.mrb[0].mxu0 %v485
      %v553 = vpop.f32.mrb[0].mxu0
      %v554 = vadd.f32 0.0, %v553
      %v555 = vpop.f32.mrb[0].mxu0
      %556 = vdwg.mxu0
      %v557 = vxor.u32 %v554, 2147483648
      %v558 = vmul.f32 %v557, 1.442695
      %v559 = vpow.pop %v558
      %v560 = vadd.f32 %v559, 1.0
      %v561 = vrcp.pop %v560
      %v562 = vmul.f32 1.0, %v561
      %v563 = vlaneseq
      %v564 = vshrl.u32 %v563, 7
      %v565 = vsub.s32 0, %v564
      %v566 = vrot.slane %v562, %v565
      %568 = vbcast.lane.b32.xlu0 %v566, 256
      %v569 = vpop.permute.xlu0 %568
      %s571 = sor.u32 256, 8
      %572 = vbcast.lane.b32.xlu0 %v566, %s571
      %v573 = vpop.permute.xlu0 %572
      %s575 = sor.u32 256, 16
      %576 = vbcast.lane.b32.xlu0 %v566, %s575
      %v577 = vpop.permute.xlu0 %576
      %s579 = sor.u32 256, 24
      %580 = vbcast.lane.b32.xlu0 %v566, %s579
      %v581 = vpop.permute.xlu0 %580
      %s583 = sor.u32 256, 32
      %584 = vbcast.lane.b32.xlu0 %v566, %s583
      %v585 = vpop.permute.xlu0 %584
      %s587 = sor.u32 256, 40
      %588 = vbcast.lane.b32.xlu0 %v566, %s587
      %v589 = vpop.permute.xlu0 %588
      %s591 = sor.u32 256, 48
      %592 = vbcast.lane.b32.xlu0 %v566, %s591
      %v593 = vpop.permute.xlu0 %592
      %s595 = sor.u32 256, 56
      %596 = vbcast.lane.b32.xlu0 %v566, %s595
      %v597 = vpop.permute.xlu0 %596
      %s599 = sor.u32 256, 64
      %600 = vbcast.lane.b32.xlu0 %v566, %s599
      %v601 = vpop.permute.xlu0 %600
      %s603 = sor.u32 256, 72
      %604 = vbcast.lane.b32.xlu0 %v566, %s603
      %v605 = vpop.permute.xlu0 %604
      %s607 = sor.u32 256, 80
      %608 = vbcast.lane.b32.xlu0 %v566, %s607
      %v609 = vpop.permute.xlu0 %608
      %s611 = sor.u32 256, 88
      %612 = vbcast.lane.b32.xlu0 %v566, %s611
      %v613 = vpop.permute.xlu0 %612
      %s615 = sor.u32 256, 96
      %616 = vbcast.lane.b32.xlu0 %v566, %s615
      %v617 = vpop.permute.xlu0 %616
      %s619 = sor.u32 256, 104
      %620 = vbcast.lane.b32.xlu0 %v566, %s619
      %v621 = vpop.permute.xlu0 %620
      %s623 = sor.u32 256, 112
      %624 = vbcast.lane.b32.xlu0 %v566, %s623
      %v625 = vpop.permute.xlu0 %624
      %s627 = sor.u32 256, 120
      %628 = vbcast.lane.b32.xlu0 %v566, %s627
      %v629 = vpop.permute.xlu0 %628
      %v630 = vmul.f32 %v171, %v569
      %v631 = vmul.f32 %v172, %v569
      %v632 = vmul.f32 %v173, %v573
      %v633 = vmul.f32 %v174, %v573
      %v634 = vmul.f32 %v175, %v577
      %v635 = vmul.f32 %v176, %v577
      %v636 = vmul.f32 %v177, %v581
      %v637 = vmul.f32 %v178, %v581
      %v638 = vmul.f32 %v179, %v585
      %v639 = vmul.f32 %v180, %v585
      %v640 = vmul.f32 %v181, %v589
      %v641 = vmul.f32 %v182, %v589
      %v642 = vmul.f32 %v183, %v593
      %v643 = vmul.f32 %v184, %v593
      %v644 = vmul.f32 %v185, %v597
      %v645 = vmul.f32 %v186, %v597
      %v646 = vmul.f32 %v187, %v601
      %v647 = vmul.f32 %v188, %v601
      %v648 = vmul.f32 %v189, %v605
      %v649 = vmul.f32 %v190, %v605
      %v650 = vmul.f32 %v191, %v609
      %v651 = vmul.f32 %v192, %v609
      %v652 = vmul.f32 %v193, %v613
      %v653 = vmul.f32 %v194, %v613
      %v654 = vmul.f32 %v195, %v617
      %v655 = vmul.f32 %v196, %v617
      %v656 = vmul.f32 %v197, %v621
      %v657 = vmul.f32 %v198, %v621
      %v658 = vmul.f32 %v199, %v625
      %v659 = vmul.f32 %v200, %v625
      %v660 = vmul.f32 %v201, %v629
      %v661 = vmul.f32 %v202, %v629
      %662 = vst [vmem:[%s170] sm:$0xff] %v630
      %663 = vst [vmem:[%s170 + $0x8] sm:$0xff] %v631
      %664 = vst [vmem:[%s170 + $0x10] sm:$0xff] %v632
      %665 = vst [vmem:[%s170 + $0x18] sm:$0xff] %v633
      %666 = vst [vmem:[%s170 + $0x20] sm:$0xff] %v634
      %667 = vst [vmem:[%s170 + $0x28] sm:$0xff] %v635
      %668 = vst [vmem:[%s170 + $0x30] sm:$0xff] %v636
      %669 = vst [vmem:[%s170 + $0x38] sm:$0xff] %v637
      %670 = vst [vmem:[%s170 + $0x40] sm:$0xff] %v638
      %671 = vst [vmem:[%s170 + $0x48] sm:$0xff] %v639
      %672 = vst [vmem:[%s170 + $0x50] sm:$0xff] %v640
      %673 = vst [vmem:[%s170 + $0x58] sm:$0xff] %v641
      %674 = vst [vmem:[%s170 + $0x60] sm:$0xff] %v642
      %675 = vst [vmem:[%s170 + $0x68] sm:$0xff] %v643
      %676 = vst [vmem:[%s170 + $0x70] sm:$0xff] %v644
      %677 = vst [vmem:[%s170 + $0x78] sm:$0xff] %v645
      %678 = vst [vmem:[%s170 + $0x80] sm:$0xff] %v646
      %679 = vst [vmem:[%s170 + $0x88] sm:$0xff] %v647
      %680 = vst [vmem:[%s170 + $0x90] sm:$0xff] %v648
      %681 = vst [vmem:[%s170 + $0x98] sm:$0xff] %v649
      %682 = vst [vmem:[%s170 + $0xa0] sm:$0xff] %v650
      %683 = vst [vmem:[%s170 + $0xa8] sm:$0xff] %v651
      %684 = vst [vmem:[%s170 + $0xb0] sm:$0xff] %v652
      %685 = vst [vmem:[%s170 + $0xb8] sm:$0xff] %v653
      %686 = vst [vmem:[%s170 + $0xc0] sm:$0xff] %v654
      %687 = vst [vmem:[%s170 + $0xc8] sm:$0xff] %v655
      %688 = vst [vmem:[%s170 + $0xd0] sm:$0xff] %v656
      %689 = vst [vmem:[%s170 + $0xd8] sm:$0xff] %v657
      %690 = vst [vmem:[%s170 + $0xe0] sm:$0xff] %v658
      %691 = vst [vmem:[%s170 + $0xe8] sm:$0xff] %v659
      %692 = vst [vmem:[%s170 + $0xf0] sm:$0xff] %v660
      %693 = vst [vmem:[%s170 + $0xf8] sm:$0xff] %v661
      %p694 = scmp.lt.s32.totalorder %s14, 1
      %s695 = scalar_select %p694, %s14, 1
      %s696 = smul.addr %s695, 32
      %s697 = smul.addr %s696, 8
      %s698 = scalar_lea.vmem %s3, %s697
      // Predicated region
      $region33: #{se_layer.1} parent=31 // pred_check
        %p699 = pneg %p100
      $region34: #{se_layer.1} parent=31 // pred_check_branch
        %701 = sbr.rel (%p699) target = $region36
      $region35: #{se_layer.1} parent=31 // pred_region
        _
      $region36: #{se_layer.1} parent=31 // pred_fallthru
        _
    $region32: #{se_layer.1} parent=5 // pred_fallthru
      _
    %p702 = scmp.le.s32.totalorder 2, %s9
    // Predicated region
    $region37: #{se_layer.1} parent=5 // pred_check
      %p703 = pneg %p702
    $region38: #{se_layer.1} parent=5 // pred_check_branch
      %705 = sbr.rel (%p703) target = $region40
    $region39: #{se_layer.1} parent=5 // pred_region
      %s706 = ssub.s32 %s9, 2
      // Predicated region
      $region41: #{se_layer.1} parent=39 // pred_check
        %p707 = pneg %p106
      $region42: #{se_layer.1} parent=39 // pred_check_branch
        %709 = sbr.rel (%p707) target = $region44
      $region43: #{se_layer.1} parent=39 // pred_region
        %p710 = scmp.lt.s32.totalorder %s15, 1
        %s711 = scalar_select %p710, %s15, 1
        %s712 = smul.addr %s711, 32
        %s713 = smul.addr %s712, 8
        %s714 = scalar_lea.vmem %s3, %s713
      $region44: #{se_layer.1} parent=39 // pred_fallthru
        _
    $region40: #{se_layer.1} parent=5 // pred_fallthru
      _
  $region6: #{se_layer.1} parent=0 // loop_footer
    %s13 = sadd.s32 1, %s9
  $region7: #{se_layer.1} parent=0 // loop_footer_branch
    %8 = sbr.rel target = $region3
  $region8: #{se_layer.1} parent=0 // loop_exit
    _

</llo_original>
